<compile_context>
chip_gen: v6e
topology: v6e:2x2x1
jax: 0.10.0
libtpu: 0.0.40
codegen_flags: <defaults>
</compile_context>

<pallas_src>
import functools

import jax
import jax.numpy as jnp
from jax.experimental import pallas as pl
from jax.experimental.pallas import tpu as pltpu

LANES = 128
CHUNK_ROWS = 1024             # compute chunk: 512 KiB f32 -> small live temporaries
MAX_BLOCK_ROWS = 8192         # DMA block: 4 MiB f32 per input per pipeline buffer
MIN_KERNEL_ELEMENTS = 1 << 20  # below this, pure-JAX fallback


def _cdiv(a, b):
    return -(-a // b)


def _round_up(x, m):
    return _cdiv(x, m) * m


@functools.lru_cache(maxsize=None)
def _num_cores():
    # 2 partial-sum slots + leading "parallel" grid axis only on v7x (2 TCs/chip).
    # Single-TC chips (v5e / v6e) use 1 so the core axis never adds a wrapped block.
    try:
        kind = jax.devices()[0].device_kind.lower()
    except Exception:  # non-TPU / uninitialized backend: 1 is always correct
        return 1
    return 2 if "v7" in kind else 1


def _bce_elementwise(p, t):
    # nn.BCELoss clamps each log term at -100.
    p = p.astype(jnp.float32)
    t = t.astype(jnp.float32)
    log_p = jnp.maximum(jnp.log(p), -100.0)
    log_1mp = jnp.maximum(jnp.log(1.0 - p), -100.0)
    return -(t * log_p + (1.0 - t) * log_1mp)


def _bce_kernel(p_ref, t_ref, o_ref, *, blocks_per_core, num_blocks,
                block_rows, chunk_rows, num_chunks, rows_in_last_block,
                has_wrapped):
    c = pl.program_id(0)          # core / partial-sum slot
    j = pl.program_id(1)          # block within this core's range
    logical = c * blocks_per_core + j

    @pl.when(j == 0)
    def _init():
        o_ref[...] = jnp.zeros_like(o_ref)

    def run_block(masked):
        @pl.loop(0, num_chunks)
        def _(ci):
            start = pl.multiple_of(ci * chunk_rows, 8)
            p = p_ref[pl.ds(start, chunk_rows), :].astype(jnp.float32)
            t = t_ref[pl.ds(start, chunk_rows), :].astype(jnp.float32)
            log_p = jnp.maximum(jnp.log(p), -100.0)
            log_1mp = jnp.maximum(jnp.log(1.0 - p), -100.0)
            loss = -(t * log_p + (1.0 - t) * log_1mp)
            if masked:
                # Only the ragged last block pays for this. Single iota, and the
                # compare is against a row-within-block static bound (no int32
                # overflow hazard for huge inputs).
                row = ci * chunk_rows + jax.lax.broadcasted_iota(
                    jnp.int32, loss.shape, 0)
                loss = jnp.where(row < rows_in_last_block, loss, 0.0)
            # (G, 8, 128) axis-0 sum = plain vreg adds (VALU only); accumulator is
            # a full (8, 128) vreg block -> unmasked full-vreg stores, no XLU.
            o_ref[...] += jnp.sum(loss.reshape(-1, 8, LANES), axis=0)

    needs_mask = rows_in_last_block != block_rows  # static Python bool

    if not needs_mask and not has_wrapped:
        run_block(masked=False)
        return

    is_last = logical == num_blocks - 1
    interior = jnp.logical_not(is_last)
    if has_wrapped:
        # Wrapped overflow iterations (v7x odd split corner case) do nothing.
        interior = jnp.logical_and(interior, logical < num_blocks)

    @pl.when(interior)
    def _interior():
        run_block(masked=False)

    @pl.when(is_last)
    def _last():
        run_block(masked=needs_mask)


def gan_bce_loss(pred_label, targets, *,
                 min_kernel_elements=MIN_KERNEL_ELEMENTS):
    """Mean BCE over all elements (matches nn.BCELoss default 'mean')."""
    assert pred_label.shape == targets.shape
    n = pred_label.size

    if n < min_kernel_elements:
        # Small discriminator outputs: XLA fusion beats a pallas_call launch.
        return jnp.mean(_bce_elementwise(pred_label, targets))

    flat_p = pred_label.reshape(-1)
    flat_t = targets.reshape(-1)

    # 128-aligned prefix goes through the kernel; the <=127-element remainder is
    # handled with a tiny jnp expression (no full-array pad / extra HBM pass).
    rows = n // LANES
    n_main = rows * LANES

    tail_sum = jnp.float32(0.0)
    if n_main < n:
        tail_sum = jnp.sum(_bce_elementwise(flat_p[n_main:], flat_t[n_main:]))
        flat_p = flat_p[:n_main]
        flat_t = flat_t[:n_main]

    if rows == 0:
        return tail_sum / n

    p2 = flat_p.reshape(rows, LANES)
    t2 = flat_t.reshape(rows, LANES)

    num_cores = _num_cores()

    # DMA-block sizing: a multiple of CHUNK_ROWS (or of 8 when the whole input is
    # smaller than one chunk) so the in-kernel chunk loop tiles the block evenly.
    if rows >= CHUNK_ROWS:
        block_rows = min(MAX_BLOCK_ROWS, _round_up(rows, CHUNK_ROWS))
        chunk_rows = CHUNK_ROWS
    else:
        block_rows = _round_up(rows, 8)
        chunk_rows = block_rows
    num_blocks = _cdiv(rows, block_rows)

    # On v7x, try to split blocks evenly across the two TensorCores so neither
    # core runs a duplicated (wrapped) block.
    if num_cores > 1 and num_blocks % num_cores != 0:
        nb = _round_up(num_blocks, num_cores)
        br = _round_up(_cdiv(rows, nb), chunk_rows)
        if _cdiv(rows, br) == nb:
            block_rows, num_blocks = br, nb

    blocks_per_core = _cdiv(num_blocks, num_cores)
    has_wrapped = num_cores * blocks_per_core != num_blocks
    rows_in_last_block = rows - (num_blocks - 1) * block_rows
    num_chunks = block_rows // chunk_rows

    if has_wrapped:
        def in_index_map(c, j):
            # Overflow iterations re-read the last valid block; the kernel skips
            # their contribution entirely.
            return (jnp.minimum(c * blocks_per_core + j, num_blocks - 1), 0)
    else:
        def in_index_map(c, j):
            return (c * blocks_per_core + j, 0)

    kernel = functools.partial(
        _bce_kernel,
        blocks_per_core=blocks_per_core, num_blocks=num_blocks,
        block_rows=block_rows, chunk_rows=chunk_rows, num_chunks=num_chunks,
        rows_in_last_block=rows_in_last_block, has_wrapped=has_wrapped)

    # Explicit VMEM budget: 2 inputs x 2 pipeline buffers + chunk-sized f32
    # temporaries + slack; capped below v7x's 64 MiB physical VMEM. (v5e's
    # default scoped limit of 16 MiB is too small for 4 MiB blocks.)
    block_in_bytes = block_rows * LANES * (p2.dtype.itemsize + t2.dtype.itemsize)
    vmem_limit = int(min(56 * 2**20, 2 * block_in_bytes + 16 * 2**20))

    partials = pl.pallas_call(
        kernel,
        out_shape=jax.ShapeDtypeStruct((num_cores * 8, LANES), jnp.float32),
        grid=(num_cores, blocks_per_core),
        in_specs=[
            pl.BlockSpec((block_rows, LANES), in_index_map),
            pl.BlockSpec((block_rows, LANES), in_index_map),
        ],
        out_specs=pl.BlockSpec((8, LANES), lambda c, j: (c, 0)),
        compiler_params=pltpu.CompilerParams(
            dimension_semantics=("parallel", "arbitrary"),
            vmem_limit_bytes=vmem_limit),
    )(p2, t2)

    # Single cross-lane reduce over <= num_cores * 1024 partial sums, then mean.
    return (jnp.sum(partials) + tail_sum) / n


def gan_bce_loss_ref(pred_label, targets):
    return jnp.mean(_bce_elementwise(pred_label, targets))


class GANBCELoss:
    """Analogue of the PyTorch module: takes (pred_dict, targets)."""

    def __call__(self, pred_dict, targets, **kwargs):
        return gan_bce_loss(pred_dict["pred_label"], targets, **kwargs)


if __name__ == "__main__":
    key = jax.random.PRNGKey(0)
    k1, k2, k3, k4, k5, k6 = jax.random.split(key, 6)

    loss_mod = GANBCELoss()

    # 1) Small NCHW discriminator map (2, 4, 16, 16); kernel path forced
    #    (normally this size takes the pure-JAX fallback).
    p_small = jax.nn.sigmoid(jax.random.normal(k1, (2, 4, 16, 16), jnp.float32))
    t_small = jax.random.bernoulli(k2, 0.5, (2, 4, 16, 16)).astype(jnp.float32)
    out_small = loss_mod({"pred_label": p_small}, t_small, min_kernel_elements=0)
    out_small = jax.block_until_ready(out_small)
    ref_small = gan_bce_loss_ref(p_small, t_small)
    assert jnp.allclose(out_small, ref_small, rtol=1e-5, atol=1e-6), (out_small, ref_small)

    # 2) Non-lane-aligned shape: exercises the ragged-last-block mask and the
    #    <=127-element jnp tail (no full-array pad).
    p_odd = jax.nn.sigmoid(jax.random.normal(k3, (2, 3, 61, 97), jnp.float32))
    t_odd = jax.random.bernoulli(k4, 0.5, (2, 3, 61, 97)).astype(jnp.float32)
    out_odd = jax.block_until_ready(gan_bce_loss(p_odd, t_odd, min_kernel_elements=0))
    ref_odd = gan_bce_loss_ref(p_odd, t_odd)
    assert jnp.allclose(out_odd, ref_odd, rtol=1e-5, atol=1e-6), (out_odd, ref_odd)

    # 3) Large enough to take the kernel path by default (multi-block,
    #    multi-chunk, unmasked fast path).
    p_big = jax.nn.sigmoid(jax.random.normal(k5, (16, 8, 128, 128), jnp.float32))
    t_big = jax.random.bernoulli(k6, 0.5, (16, 8, 128, 128)).astype(jnp.float32)
    out_big = jax.block_until_ready(gan_bce_loss(p_big, t_big))
    ref_big = gan_bce_loss_ref(p_big, t_big)
    assert jnp.allclose(out_big, ref_big, rtol=1e-4, atol=1e-6), (out_big, ref_big)

    print("KERNEL_OK")
</pallas_src>

<mosaic_0001>
module attributes {stable_mosaic.version = 11 : i64} {
  func.func @_bce_kernel(%arg0: i32, %arg1: i32, %arg2: memref<16x128xf32, #tpu.memory_space<vmem>>, %arg3: memref<16x128xf32, #tpu.memory_space<vmem>>, %arg4: memref<8x128xf32, #tpu.memory_space<vmem>>) attributes {dimension_semantics = [#tpu.dimension_semantics<parallel>, #tpu.dimension_semantics<arbitrary>], iteration_bounds = array<i64: 1, 1>, scalar_prefetch = 0 : i64, scratch_operands = 0 : i64, tpu.core_type = #tpu.core_type<tc>, window_params = [{transform_indices = @transform_0, window_bounds = array<i64: 16, 128>}, {transform_indices = @transform_1, window_bounds = array<i64: 16, 128>}, {transform_indices = @transform_2, window_bounds = array<i64: 8, 128>}]} {
    %c0_i32 = arith.constant 0 : i32
    %0 = arith.cmpi eq, %arg1, %c0_i32 : i32
    %1 = arith.extui %0 : i1 to i32
    %c0_i32_0 = arith.constant 0 : i32
    %2 = arith.cmpi ne, %1, %c0_i32_0 : i32
    scf.if %2 {
      %cst_14 = arith.constant 0.000000e+00 : f32
      %31 = vector.broadcast %cst_14 : f32 to vector<8x128xf32>
      %c0_15 = arith.constant 0 : index
      %c0_16 = arith.constant 0 : index
      %32 = vector.load %arg4[%c0_15, %c0_16] : memref<8x128xf32, #tpu.memory_space<vmem>>, vector<8x128xf32>
      tpu.vector_store %arg4[%c0_15, %c0_16], %31 {strides = array<i32>} : memref<8x128xf32, #tpu.memory_space<vmem>>, vector<8x128xf32>,
    } else {
    }
    %c0_i32_1 = arith.constant 0 : i32
    %c1_i32 = arith.constant 1 : i32
    %3 = arith.muli %c0_i32_1, %c1_i32 : i32
    %c0_i32_2 = arith.constant 0 : i32
    %4 = arith.addi %c0_i32_2, %3 : i32
    %c16_i32 = arith.constant 16 : i32
    %5 = arith.muli %4, %c16_i32 : i32
    %6 = tpu.assume_multiple %5, 8 : i32
    %7 = arith.index_cast %6 : i32 to index
    %c0 = arith.constant 0 : index
    %8 = vector.load %arg2[%7, %c0] : memref<16x128xf32, #tpu.memory_space<vmem>>, vector<16x128xf32>
    %9 = arith.index_cast %6 : i32 to index
    %c0_3 = arith.constant 0 : index
    %10 = vector.load %arg3[%9, %c0_3] : memref<16x128xf32, #tpu.memory_space<vmem>>, vector<16x128xf32>
    %11 = math.log %8 : vector<16x128xf32>
    %cst = arith.constant -1.000000e+02 : f32
    %12 = vector.broadcast %cst : f32 to vector<16x128xf32>
    %13 = arith.maximumf %11, %12 : vector<16x128xf32>
    %cst_4 = arith.constant 1.000000e+00 : f32
    %14 = vector.broadcast %cst_4 : f32 to vector<16x128xf32>
    %15 = arith.subf %14, %8 : vector<16x128xf32>
    %16 = math.log %15 : vector<16x128xf32>
    %cst_5 = arith.constant -1.000000e+02 : f32
    %17 = vector.broadcast %cst_5 : f32 to vector<16x128xf32>
    %18 = arith.maximumf %16, %17 : vector<16x128xf32>
    %19 = arith.mulf %10, %13 : vector<16x128xf32>
    %cst_6 = arith.constant 1.000000e+00 : f32
    %20 = vector.broadcast %cst_6 : f32 to vector<16x128xf32>
    %21 = arith.subf %20, %10 : vector<16x128xf32>
    %22 = arith.mulf %21, %18 : vector<16x128xf32>
    %23 = arith.addf %19, %22 : vector<16x128xf32>
    %cst_7 = arith.constant 0.000000e+00 : f32
    %24 = vector.broadcast %cst_7 : f32 to vector<16x128xf32>
    %25 = arith.subf %24, %23 : vector<16x128xf32>
    %c0_8 = arith.constant 0 : index
    %c0_9 = arith.constant 0 : index
    %26 = vector.load %arg4[%c0_8, %c0_9] : memref<8x128xf32, #tpu.memory_space<vmem>>, vector<8x128xf32>
    %27 = vector.shape_cast %25 : vector<16x128xf32> to vector<2x8x128xf32>
    %cst_10 = arith.constant dense<0.000000e+00> : vector<8x128xf32>
    %28 = vector.multi_reduction <add>, %27, %cst_10 [0] : vector<2x8x128xf32> to vector<8x128xf32>
    %29 = arith.addf %26, %28 : vector<8x128xf32>
    %c0_11 = arith.constant 0 : index
    %c0_12 = arith.constant 0 : index
    %30 = vector.load %arg4[%c0_11, %c0_12] : memref<8x128xf32, #tpu.memory_space<vmem>>, vector<8x128xf32>
    tpu.vector_store %arg4[%c0_11, %c0_12], %29 {strides = array<i32>} : memref<8x128xf32, #tpu.memory_space<vmem>>, vector<8x128xf32>,
    %c1_i32_13 = arith.constant 1 : i32
    return
  }
  func.func @transform_0(%arg0: i32, %arg1: i32) -> (i32, i32) {
    %c1_i32 = arith.constant 1 : i32
    %0 = arith.muli %arg0, %c1_i32 : i32
    %1 = arith.addi %0, %arg1 : i32
    %c0_i32 = arith.constant 0 : i32
    %c0_i32_0 = arith.constant 0 : i32
    return %1, %c0_i32 : i32, i32
  }
  func.func @transform_1(%arg0: i32, %arg1: i32) -> (i32, i32) {
    %c1_i32 = arith.constant 1 : i32
    %0 = arith.muli %arg0, %c1_i32 : i32
    %1 = arith.addi %0, %arg1 : i32
    %c0_i32 = arith.constant 0 : i32
    %c0_i32_0 = arith.constant 0 : i32
    return %1, %c0_i32 : i32, i32
  }
  func.func @transform_2(%arg0: i32, %arg1: i32) -> (i32, i32) {
    %c0_i32 = arith.constant 0 : i32
    %c0_i32_0 = arith.constant 0 : i32
    return %arg0, %c0_i32 : i32, i32
  }
}

</mosaic_0001>

<llo_original>
// kernel: tpu_custom_call.1
$region0: #{tpu_custom_call.1}
  #allocation0 [shape = 'u32[]', space=smem, size = 0x4, offset = 0x4, fixed_abs, tag = 'smem constant byte address 0x4 - core index']
  #allocation1 [shape = 'u32[144,128]{1,0:T(1,128)}', space=vmem, size = 0x12000, scoped, tag = 'internal scratch']
  %s0 = inlined_call_operand.hbm [shape: f32[16,128], index: 0, kind: input, shape index: {}]
  %s1 = inlined_call_operand.hbm [shape: f32[16,128], index: 1, kind: input, shape index: {}]
  %s2 = inlined_call_operand.hbm [shape: f32[8,128], index: 2, kind: output, shape index: {}]
  %s3 = sld [smem:[#allocation0]]
  $region30: #{tpu_custom_call.1} parent=0
    _
  %s5 = ssub.s32 1, %s3
  %s6 = scalar_select 0, %s5, %s3
  $region1: #{tpu_custom_call.1} parent=0
    #allocation2 [shape = 'u8[8192]{0}', space=vmem, size = 0x2000, scoped, tag = 'input window, operand 0, single buffered']
    #allocation3 [shape = 's32[1]{0}', space=sflag, size = 0x4, scoped, tag = 'scoped memory for tpu_custom_call.1']
    #allocation4 [shape = 's32[1]{0}', space=sflag, size = 0x4, scoped, tag = 'scoped memory for tpu_custom_call.1']
    #allocation5 [shape = 'u8[8192]{0}', space=vmem, size = 0x2000, scoped, tag = 'input window, operand 1, single buffered']
    #allocation6 [shape = 's32[1]{0}', space=sflag, size = 0x4, scoped, tag = 'scoped memory for tpu_custom_call.1']
    #allocation7 [shape = 'u8[4096]{0}', space=vmem, size = 0x1000, scoped, tag = 'output window, operand 0, single buffered']
    %7 = vsyncpa [#allocation3], 0
    %8 = vsyncpa [#allocation6], 0
    %9 = vsyncpa [#allocation4], 0
    // Predicated region
    $region2: #{tpu_custom_call.1} parent=1 // pred_check
      _
    $region3: #{tpu_custom_call.1} parent=1 // pred_check_branch
      %11 = sbr.rel (0) target = $region5
    $region4: #{tpu_custom_call.1} parent=1 // pred_region
      %s12 = sadd.s32 0, 0
      %s13 = smul.u32 2, %s12
      %s15 = ssub.s32 256, 256
      %16 = vsyncadd [#allocation3], %s15
      %s17 = smul.addr %s13, 128
      %s18 = scalar_lea.hbm %s0, %s17
      %s19 = sshll.u32 [#allocation2], 4
      %s20 = int_to_ptr.vmem [resolvable:$true] %s19
      %25 = dma.hbm_to_vmem [thread:$0]  %s18, 256, %s20, [#allocation3], 128, 128, 8
    $region5: #{tpu_custom_call.1} parent=1 // pred_fallthru
      _
    // Predicated region
    $region6: #{tpu_custom_call.1} parent=1 // pred_check
      _
    $region7: #{tpu_custom_call.1} parent=1 // pred_check_branch
      %27 = sbr.rel (0) target = $region9
    $region8: #{tpu_custom_call.1} parent=1 // pred_region
      %s28 = sadd.s32 0, 0
      %s29 = smul.u32 2, %s28
      %s31 = ssub.s32 256, 256
      %32 = vsyncadd [#allocation6], %s31
      %s33 = smul.addr %s29, 128
      %s34 = scalar_lea.hbm %s1, %s33
      %s35 = sshll.u32 [#allocation5], 4
      %s36 = int_to_ptr.vmem [resolvable:$true] %s35
      %41 = dma.hbm_to_vmem [thread:$0]  %s34, 256, %s36, [#allocation6], 128, 128, 8
    $region9: #{tpu_custom_call.1} parent=1 // pred_fallthru
      _
    // Predicated region
    $region10: #{tpu_custom_call.1} parent=1 // pred_check
      _
    $region11: #{tpu_custom_call.1} parent=1 // pred_check_branch
      %43 = sbr.rel (0) target = $region13
    $region12: #{tpu_custom_call.1} parent=1 // pred_region
      %44 = dma.done [#allocation3], 256
    $region13: #{tpu_custom_call.1} parent=1 // pred_fallthru
      _
    // Predicated region
    $region14: #{tpu_custom_call.1} parent=1 // pred_check
      _
    $region15: #{tpu_custom_call.1} parent=1 // pred_check_branch
      %46 = sbr.rel (0) target = $region17
    $region16: #{tpu_custom_call.1} parent=1 // pred_region
      %47 = dma.done [#allocation6], 256
    $region17: #{tpu_custom_call.1} parent=1 // pred_fallthru
      _
    %s48 = sadd.s32 0, 0
    %s49 = smul.u32 2, %s48
    %s50 = sadd.s32 0, 0
    %s51 = smul.u32 2, %s50
    %p52 = scmp.eq.s32.totalorder 0, 0
    // Predicated region
    $region18: #{tpu_custom_call.1} parent=1 // pred_check
      %p53 = pneg %p52
    $region19: #{tpu_custom_call.1} parent=1 // pred_check_branch
      %55 = sbr.rel (%p53) target = $region21
    $region20: #{tpu_custom_call.1} parent=1 // pred_region
      %56 = vst [vmem:[#allocation7] sm:$0xff] 0.0
    $region21: #{tpu_custom_call.1} parent=1 // pred_fallthru
      _
    %v57 = vld [vmem:[#allocation2] sm:$0xff]
    %v58 = vld [vmem:[#allocation2 + $0x8] sm:$0xff]
    %v59 = vld [vmem:[#allocation5] sm:$0xff]
    %v60 = vld [vmem:[#allocation5 + $0x8] sm:$0xff]
    %v61 = vlog2.pop %v57
    %v62 = vmul.f32 %v61, 0.6931472
    %v63 = vlog2.pop %v58
    %v64 = vmul.f32 %v63, 0.6931472
    %v65 = vmax.f32 %v62, -100.0
    %v66 = vmax.f32 %v64, -100.0
    %v67 = vsub.f32 1.0, %v57
    %v68 = vsub.f32 1.0, %v58
    %v69 = vlog2.pop %v67
    %v70 = vmul.f32 %v69, 0.6931472
    %v71 = vlog2.pop %v68
    %v72 = vmul.f32 %v71, 0.6931472
    %v73 = vmax.f32 %v70, -100.0
    %v74 = vmax.f32 %v72, -100.0
    %v75 = vmul.f32 %v59, %v65
    %v76 = vmul.f32 %v60, %v66
    %v77 = vsub.f32 1.0, %v59
    %v78 = vsub.f32 1.0, %v60
    %v79 = vmul.f32 %v77, %v73
    %v80 = vmul.f32 %v78, %v74
    %v81 = vadd.f32 %v75, %v79
    %v82 = vadd.f32 %v76, %v80
    %v83 = vsub.f32 0.0, %v81
    %v84 = vsub.f32 0.0, %v82
    %v85 = vld [vmem:[#allocation7] sm:$0xff]
    %v86 = vadd.f32 %v83, %v84
    %v87 = vadd.f32 %v85, %v86
    %88 = vst [vmem:[#allocation7] sm:$0xff] %v87
    // Predicated region
    $region22: #{tpu_custom_call.1} parent=1 // pred_check
      _
    $region23: #{tpu_custom_call.1} parent=1 // pred_check_branch
      %90 = sbr.rel (0) target = $region25
    $region24: #{tpu_custom_call.1} parent=1 // pred_region
      %s92 = ssub.s32 128, 128
      %93 = vsyncadd [#allocation4], %s92
      %s95 = sshll.u32 [#allocation7], 4
      %s96 = int_to_ptr.vmem [resolvable:$true] %s95
      %98 = dma.vmem_to_hbm [thread:$0]  %s96, 128, %s2, [#allocation4]
    $region25: #{tpu_custom_call.1} parent=1 // pred_fallthru
      _
    // Predicated region
    $region26: #{tpu_custom_call.1} parent=1 // pred_check
      _
    $region27: #{tpu_custom_call.1} parent=1 // pred_check_branch
      %100 = sbr.rel (0) target = $region29
    $region28: #{tpu_custom_call.1} parent=1 // pred_region
      %101 = dma.done [#allocation4], 128
    $region29: #{tpu_custom_call.1} parent=1 // pred_fallthru
      _
    %102 = vsyncpa [#allocation3], 1
    %103 = vsyncpa [#allocation6], 1
    %104 = vsyncpa [#allocation4], 1

</llo_original>
